<compile_context>
chip_gen: v6e
topology: v6e:2x2x1
jax: 0.10.0
libtpu: 0.0.40
codegen_flags: <defaults>
</compile_context>

<pallas_src>
import jax
import jax.numpy as jnp
from jax.experimental import pallas as pl
from jax.experimental.pallas import tpu as pltpu


def _round_up(x, m):
    return ((x + m - 1) // m) * m


# ---------------------------------------------------------------------------
# Parameter glue: band matrices equivalent to the strided (de)convs, folded
# through the L/8 bottleneck.  Runs once per weight set, outside the hot path.
# ---------------------------------------------------------------------------
def _conv1d_matrix(w, L_in):
    # Conv1d(1,1,kernel=3,stride=2,padding=1): y[i] = sum_k w[k] * x[2*i - 1 + k]
    L_out = L_in // 2
    M = jnp.zeros((L_in, L_out), jnp.float32)
    i = jnp.arange(L_out)
    for k in range(3):
        j = 2 * i - 1 + k
        valid = (j >= 0) & (j < L_in)
        M = M.at[jnp.where(valid, j, 0), i].add(jnp.where(valid, w[k], 0.0))
    return M


def _deconv1d_matrix(w, L_in):
    # ConvTranspose1d(1,1,kernel=3,stride=2,padding=1,output_padding=1):
    # y[2*i - 1 + k] += w[k] * x[i], L_out = 2 * L_in
    L_out = 2 * L_in
    M = jnp.zeros((L_in, L_out), jnp.float32)
    i = jnp.arange(L_in)
    for k in range(3):
        o = 2 * i - 1 + k
        valid = (o >= 0) & (o < L_out)
        M = M.at[i, jnp.where(valid, o, 0)].add(jnp.where(valid, w[k], 0.0))
    return M


def fold_conv_autoencoder_params(enc_w, enc_b, dec_w, dec_b, L):
    """Fold the 6-layer affine chain through the L/8 bottleneck.

    Returns (m_enc (L, L/8) bf16, b_enc (L/8,) f32, m_dec (L/8, L) bf16,
    b_dec (L,) f32) such that  y = (x @ m_enc + b_enc) @ m_dec + b_dec.
    Never materializes the dense (L, L) operator.
    """
    # Encoder: L -> L/2 -> L/4 -> L/8
    e1 = _conv1d_matrix(enc_w[0], L)
    e2 = _conv1d_matrix(enc_w[1], L // 2)
    e3 = _conv1d_matrix(enc_w[2], L // 4)
    m_enc = e1 @ e2 @ e3                                             # (L, L/8)
    b_enc = (jnp.full((L // 2,), enc_b[0], jnp.float32) @ e2 + enc_b[1]) @ e3 + enc_b[2]

    # Decoder: L/8 -> L/4 -> L/2 -> L
    d1 = _deconv1d_matrix(dec_w[0], L // 8)
    d2 = _deconv1d_matrix(dec_w[1], L // 4)
    d3 = _deconv1d_matrix(dec_w[2], L // 2)
    m_dec = d1 @ d2 @ d3                                             # (L/8, L)
    b_dec = (jnp.full((L // 4,), dec_b[0], jnp.float32) @ d2 + dec_b[1]) @ d3 + dec_b[2]

    # bf16 weights for MXU throughput / halved weight VMEM; f32 biases.
    # (Two-matmul factorization also reduces the cancellation seen when
    # rounding a fully-folded dense operator to bf16.)
    return (m_enc.astype(jnp.bfloat16), b_enc.astype(jnp.float32),
            m_dec.astype(jnp.bfloat16), b_dec.astype(jnp.float32))


# ---------------------------------------------------------------------------
# Pallas kernel: two chained MXU matmuls (bf16 in, f32 acc) per batch tile.
# ---------------------------------------------------------------------------
def cae_kernel(x_ref, me_ref, be_ref, md_ref, bd_ref, o_ref):
    # TODO(synk): nn.Dropout implemented as identity (eval-mode semantics);
    # training-mode stochastic masking is omitted.
    # Encoder: (tile_n, L) @ (L, L/8) -> f32 latent, add folded encoder bias.
    h = jnp.dot(x_ref[...], me_ref[...], preferred_element_type=jnp.float32)
    h = (h + be_ref[...]).astype(jnp.bfloat16)          # be_ref is (1, L/8)
    # Decoder: (tile_n, L/8) @ (L/8, L) -> f32 output, add folded decoder bias.
    y = jnp.dot(h, md_ref[...], preferred_element_type=jnp.float32)
    o_ref[...] = (y + bd_ref[...]).astype(o_ref.dtype)  # bd_ref is (1, L)


def conv_autoencoder_forward(x_ncl, m_enc, b_enc, m_dec, b_dec):
    """x_ncl: (N, 1, L) float32.  Folded params from fold_conv_autoencoder_params."""
    N, C, L = x_ncl.shape
    Lb = L // 8
    assert C == 1 and L % 8 == 0
    assert m_enc.shape == (L, Lb) and m_dec.shape == (Lb, L)

    x = x_ncl.reshape(N, L).astype(jnp.bfloat16)        # single cast (bf16 MXU operand)
    be_row = b_enc.reshape(1, Lb).astype(jnp.float32)
    bd_row = b_dec.reshape(1, L).astype(jnp.float32)

    # ---- VMEM budget from actual chip capacity (with headroom) ------------
    try:
        vmem_cap = int(pltpu.get_tpu_info().vmem_capacity_bytes)
    except Exception:
        vmem_cap = 64 << 20                             # conservative (v7x per-TC)
    budget = int(vmem_cap * 0.85)

    weight_bytes = 2 * L * Lb * 2 + (Lb + L) * 4        # single-buffered weights + biases

    def _io_bytes(t):                                   # double-buffered x (bf16) + out (f32)
        return 2 * t * L * 2 + 2 * t * L * 4

    # Batch tile: large (amortize ~0.35us/step grid overhead, approach HBM
    # roofline), 16-row aligned for bf16 sublane packing, shrunk only if the
    # VMEM footprint would overflow.
    tile_n = min(512, _round_up(N, 16))
    while tile_n > 16 and weight_bytes + _io_bytes(tile_n) + (2 << 20) > budget:
        tile_n = max(16, _round_up(tile_n // 2, 16))
    # TODO(synk): for very large L where even the factorized weights cannot
    # stay resident, add a K-reduction grid axis with an f32 VMEM accumulator.

    # Only pad when the batch is smaller than one tile; otherwise rely on the
    # ragged last block (no extra full HBM read/write of x, no output copy).
    if N < tile_n:
        x = jnp.pad(x, ((0, tile_n - N), (0, 0)))
    n_rows = x.shape[0]
    grid = (pl.cdiv(n_rows, tile_n),)

    vmem_limit = min(weight_bytes + _io_bytes(tile_n) + (4 << 20), int(vmem_cap * 0.9))

    cost = pl.CostEstimate(
        flops=4 * n_rows * L * Lb,                      # two (.., L, Lb) matmuls
        transcendentals=0,
        bytes_accessed=n_rows * L * 2 + 2 * L * Lb * 2 + (Lb + L) * 4 + n_rows * L * 4,
    )

    const2 = lambda i: (0, 0)
    out = pl.pallas_call(
        cae_kernel,
        out_shape=jax.ShapeDtypeStruct((n_rows, L), jnp.float32),
        grid_spec=pltpu.PrefetchScalarGridSpec(
            num_scalar_prefetch=0,
            grid=grid,
            in_specs=[
                pl.BlockSpec((tile_n, L), lambda i: (i, 0)),   # x tile (pipelined)
                # Grid-invariant operands: resident, single-buffered.
                pl.BlockSpec((L, Lb), const2, pipeline_mode=pl.Buffered(1)),
                pl.BlockSpec((1, Lb), const2, pipeline_mode=pl.Buffered(1)),
                pl.BlockSpec((Lb, L), const2, pipeline_mode=pl.Buffered(1)),
                pl.BlockSpec((1, L), const2, pipeline_mode=pl.Buffered(1)),
            ],
            out_specs=pl.BlockSpec((tile_n, L), lambda i: (i, 0)),
        ),
        compiler_params=pltpu.CompilerParams(
            # TODO(synk): on v7x, pltpu.CORE_PARALLEL on this axis shards batch
            # tiles across both TensorCores; PARALLEL kept for v5e/v6e portability.
            dimension_semantics=(pltpu.PARALLEL,),
            vmem_limit_bytes=vmem_limit,
        ),
        cost_estimate=cost,
    )(x, m_enc, be_row, m_dec, bd_row)

    if n_rows != N:
        out = out[:N]
    return out.reshape(N, 1, L)


if __name__ == "__main__":
    key = jax.random.PRNGKey(0)
    kx, kw1, kb1, kw2, kb2 = jax.random.split(key, 5)

    N, L = 2, 128
    x = jax.random.normal(kx, (N, 1, L), dtype=jnp.float32)

    # Deterministic init mimicking PyTorch's U(-1/sqrt(fan_in), 1/sqrt(fan_in)),
    # fan_in = in_channels * kernel_size = 3.
    bound = 1.0 / jnp.sqrt(3.0)
    enc_w = jax.random.uniform(kw1, (3, 3), minval=-bound, maxval=bound)
    enc_b = jax.random.uniform(kb1, (3,), minval=-bound, maxval=bound)
    dec_w = jax.random.uniform(kw2, (3, 3), minval=-bound, maxval=bound)
    dec_b = jax.random.uniform(kb2, (3,), minval=-bound, maxval=bound)

    # Fold once outside the per-call hot path (inference weights are fixed);
    # the steady-state cost is then only the Pallas kernel.
    m_enc, b_enc, m_dec, b_dec = fold_conv_autoencoder_params(enc_w, enc_b, dec_w, dec_b, L)

    y = jax.jit(conv_autoencoder_forward)(x, m_enc, b_enc, m_dec, b_dec)
    jax.block_until_ready(y)
    assert y.shape == (N, 1, L) and y.dtype == jnp.float32
    print("KERNEL_OK")
</pallas_src>

<mosaic_0001>
module attributes {stable_mosaic.version = 11 : i64} {
  func.func @cae_kernel(%arg0: i32, %arg1: memref<16x128xbf16, #tpu.memory_space<vmem>>, %arg2: memref<128x16xbf16, #tpu.memory_space<vmem>>, %arg3: memref<1x16xf32, #tpu.memory_space<vmem>>, %arg4: memref<16x128xbf16, #tpu.memory_space<vmem>>, %arg5: memref<1x128xf32, #tpu.memory_space<vmem>>, %arg6: memref<16x128xf32, #tpu.memory_space<vmem>>) attributes {dimension_semantics = [#tpu.dimension_semantics<parallel>], iteration_bounds = array<i64: 1>, scalar_prefetch = 0 : i64, scratch_operands = 0 : i64, tpu.core_type = #tpu.core_type<tc>, window_params = [{transform_indices = @transform_0, window_bounds = array<i64: 16, 128>}, {pipeline_mode = #tpu.pipeline_mode<synchronous>, transform_indices = @transform_1, window_bounds = array<i64: 128, 16>}, {pipeline_mode = #tpu.pipeline_mode<synchronous>, transform_indices = @transform_2, window_bounds = array<i64: 1, 16>}, {pipeline_mode = #tpu.pipeline_mode<synchronous>, transform_indices = @transform_3, window_bounds = array<i64: 16, 128>}, {pipeline_mode = #tpu.pipeline_mode<synchronous>, transform_indices = @transform_4, window_bounds = array<i64: 1, 128>}, {transform_indices = @transform_5, window_bounds = array<i64: 16, 128>}]} {
    %c0 = arith.constant 0 : index
    %c0_0 = arith.constant 0 : index
    %0 = vector.load %arg1[%c0, %c0_0] : memref<16x128xbf16, #tpu.memory_space<vmem>>, vector<16x128xbf16>
    %c0_1 = arith.constant 0 : index
    %c0_2 = arith.constant 0 : index
    %1 = vector.load %arg2[%c0_1, %c0_2] : memref<128x16xbf16, #tpu.memory_space<vmem>>, vector<128x16xbf16>
    %cst = arith.constant dense<0.000000e+00> : vector<16x16xf32>
    %2 = tpu.matmul %0, %1, %cst {dimension_numbers = #tpu.dot_dimension_numbers<[1], [0], [0], [1], [0, 0, 1, 1], [], []>} : vector<16x128xbf16>, vector<128x16xbf16>, vector<16x16xf32> -> vector<16x16xf32>
    %c0_3 = arith.constant 0 : index
    %c0_4 = arith.constant 0 : index
    %3 = vector.load %arg3[%c0_3, %c0_4] : memref<1x16xf32, #tpu.memory_space<vmem>>, vector<1x16xf32>
    %4 = vector.broadcast %3 : vector<1x16xf32> to vector<16x16xf32>
    %5 = arith.addf %2, %4 : vector<16x16xf32>
    %6 = arith.truncf %5 : vector<16x16xf32> to vector<16x16xbf16>
    %c0_5 = arith.constant 0 : index
    %c0_6 = arith.constant 0 : index
    %7 = vector.load %arg4[%c0_5, %c0_6] : memref<16x128xbf16, #tpu.memory_space<vmem>>, vector<16x128xbf16>
    %cst_7 = arith.constant dense<0.000000e+00> : vector<16x128xf32>
    %8 = tpu.matmul %6, %7, %cst_7 {dimension_numbers = #tpu.dot_dimension_numbers<[1], [0], [0], [1], [0, 0, 1, 1], [], []>} : vector<16x16xbf16>, vector<16x128xbf16>, vector<16x128xf32> -> vector<16x128xf32>
    %c0_8 = arith.constant 0 : index
    %c0_9 = arith.constant 0 : index
    %9 = vector.load %arg5[%c0_8, %c0_9] : memref<1x128xf32, #tpu.memory_space<vmem>>, vector<1x128xf32>
    %10 = vector.broadcast %9 : vector<1x128xf32> to vector<16x128xf32>
    %11 = arith.addf %8, %10 : vector<16x128xf32>
    %c0_10 = arith.constant 0 : index
    %c0_11 = arith.constant 0 : index
    %12 = vector.load %arg6[%c0_10, %c0_11] : memref<16x128xf32, #tpu.memory_space<vmem>>, vector<16x128xf32>
    tpu.vector_store %arg6[%c0_10, %c0_11], %11 {strides = array<i32>} : memref<16x128xf32, #tpu.memory_space<vmem>>, vector<16x128xf32>,
    return
  }
  func.func @transform_0(%arg0: i32) -> (i32, i32) {
    %c0_i32 = arith.constant 0 : i32
    %c0_i32_0 = arith.constant 0 : i32
    return %arg0, %c0_i32 : i32, i32
  }
  func.func @transform_1(%arg0: i32) -> (i32, i32) {
    %c0_i32 = arith.constant 0 : i32
    %c0_i32_0 = arith.constant 0 : i32
    %c0_i32_1 = arith.constant 0 : i32
    return %c0_i32, %c0_i32_0 : i32, i32
  }
  func.func @transform_2(%arg0: i32) -> (i32, i32) {
    %c0_i32 = arith.constant 0 : i32
    %c0_i32_0 = arith.constant 0 : i32
    %c0_i32_1 = arith.constant 0 : i32
    return %c0_i32, %c0_i32_0 : i32, i32
  }
  func.func @transform_3(%arg0: i32) -> (i32, i32) {
    %c0_i32 = arith.constant 0 : i32
    %c0_i32_0 = arith.constant 0 : i32
    %c0_i32_1 = arith.constant 0 : i32
    return %c0_i32, %c0_i32_0 : i32, i32
  }
  func.func @transform_4(%arg0: i32) -> (i32, i32) {
    %c0_i32 = arith.constant 0 : i32
    %c0_i32_0 = arith.constant 0 : i32
    %c0_i32_1 = arith.constant 0 : i32
    return %c0_i32, %c0_i32_0 : i32, i32
  }
  func.func @transform_5(%arg0: i32) -> (i32, i32) {
    %c0_i32 = arith.constant 0 : i32
    %c0_i32_0 = arith.constant 0 : i32
    return %arg0, %c0_i32 : i32, i32
  }
}

</mosaic_0001>

<llo_original>
// kernel: conv_autoencoder_forward.1
$region0: #{conv_autoencoder_forward.1}
  #allocation0 [shape = 'u32[]', space=smem, size = 0x4, offset = 0x4, fixed_abs, tag = 'smem constant byte address 0x4 - core index']
  #allocation1 [shape = 'u32[144,128]{1,0:T(1,128)}', space=vmem, size = 0x12000, scoped, tag = 'internal scratch']
  %s0 = inlined_call_operand.vmem [shape: bf16[16,128], index: 0, kind: input, shape index: {}]
  %s1 = inlined_call_operand.vmem [shape: bf16[128,16], index: 1, kind: input, shape index: {}]
  %s2 = inlined_call_operand.vmem [shape: f32[1,16], index: 2, kind: input, shape index: {}]
  %s3 = inlined_call_operand.vmem [shape: bf16[16,128], index: 3, kind: input, shape index: {}]
  %s4 = inlined_call_operand.vmem [shape: f32[1,128], index: 4, kind: input, shape index: {}]
  %s5 = inlined_call_operand.vmem [shape: f32[16,128], index: 5, kind: output, shape index: {}]
  %s6 = sld [smem:[#allocation0]]
  $region30: #{conv_autoencoder_forward.1} parent=0
    _
  %s8 = ssub.s32 1, %s6
  %s9 = scalar_select 0, %s8, %s6
  // Predicated region
  $region2: #{conv_autoencoder_forward.1} parent=0 // pred_check
    _
  $region3: #{conv_autoencoder_forward.1} parent=0 // pred_check_branch
    %11 = sbr.rel (0) target = $region5
  $region4: #{conv_autoencoder_forward.1} parent=0 // pred_region
    _
  $region5: #{conv_autoencoder_forward.1} parent=0 // pred_fallthru
    _
  // Predicated region
  $region6: #{conv_autoencoder_forward.1} parent=0 // pred_check
    _
  $region7: #{conv_autoencoder_forward.1} parent=0 // pred_check_branch
    %13 = sbr.rel (0) target = $region9
  $region8: #{conv_autoencoder_forward.1} parent=0 // pred_region
    _
  $region9: #{conv_autoencoder_forward.1} parent=0 // pred_fallthru
    _
  // Predicated region
  $region10: #{conv_autoencoder_forward.1} parent=0 // pred_check
    _
  $region11: #{conv_autoencoder_forward.1} parent=0 // pred_check_branch
    %15 = sbr.rel (0) target = $region13
  $region12: #{conv_autoencoder_forward.1} parent=0 // pred_region
    _
  $region13: #{conv_autoencoder_forward.1} parent=0 // pred_fallthru
    _
  // Predicated region
  $region14: #{conv_autoencoder_forward.1} parent=0 // pred_check
    _
  $region15: #{conv_autoencoder_forward.1} parent=0 // pred_check_branch
    %17 = sbr.rel (0) target = $region17
  $region16: #{conv_autoencoder_forward.1} parent=0 // pred_region
    _
  $region17: #{conv_autoencoder_forward.1} parent=0 // pred_fallthru
    _
  // Predicated region
  $region18: #{conv_autoencoder_forward.1} parent=0 // pred_check
    _
  $region19: #{conv_autoencoder_forward.1} parent=0 // pred_check_branch
    %19 = sbr.rel (0) target = $region21
  $region20: #{conv_autoencoder_forward.1} parent=0 // pred_region
    _
  $region21: #{conv_autoencoder_forward.1} parent=0 // pred_fallthru
    _
  %v21 = vld [vmem:[%s0] sm:$0xf]
  %v22 = vld [vmem:[%s0 + $0x4] sm:$0xf]
  %v23 = vld [vmem:[%s1] sm:$0xf]
  %v24 = vld [vmem:[%s1 + $0x4] sm:$0xf]
  %v25 = vld [vmem:[%s1 + $0x8] sm:$0xf]
  %v26 = vld [vmem:[%s1 + $0xc] sm:$0xf]
  %v27 = vld [vmem:[%s1 + $0x10] sm:$0xf]
  %v28 = vld [vmem:[%s1 + $0x14] sm:$0xf]
  %v29 = vld [vmem:[%s1 + $0x18] sm:$0xf]
  %v30 = vld [vmem:[%s1 + $0x1c] sm:$0xf]
  %v31 = vld [vmem:[%s1 + $0x20] sm:$0xf]
  %v32 = vld [vmem:[%s1 + $0x24] sm:$0xf]
  %v33 = vld [vmem:[%s1 + $0x28] sm:$0xf]
  %v34 = vld [vmem:[%s1 + $0x2c] sm:$0xf]
  %v35 = vld [vmem:[%s1 + $0x30] sm:$0xf]
  %v36 = vld [vmem:[%s1 + $0x34] sm:$0xf]
  %v37 = vld [vmem:[%s1 + $0x38] sm:$0xf]
  %v38 = vld [vmem:[%s1 + $0x3c] sm:$0xf]
  %v39 = vld [vmem:[%s2] sm:$0x1]
  %v41 = vlaneseq
  %v42 = vshrl.u32 %v41, 7
  %v43 = vsub.s32 0, %v42
  %v44 = vrot.slane %v39, %v43
  %v48 = vunpack.c.l.b16 %v21
  %v49 = vunpack.c.l.b16 %v22
  %v50 = vpack.c.b16 %v49, %v48
  %v68 = vunpack.c.l.b16 %v23
  %v69 = vunpack.c.l.b16 %v24
  %v70 = vunpack.c.l.b16 %v25
  %v71 = vunpack.c.l.b16 %v26
  %v72 = vunpack.c.l.b16 %v27
  %v73 = vunpack.c.l.b16 %v28
  %v74 = vunpack.c.l.b16 %v29
  %v75 = vunpack.c.l.b16 %v30
  %v76 = vunpack.c.l.b16 %v31
  %v77 = vunpack.c.l.b16 %v32
  %v78 = vunpack.c.l.b16 %v33
  %v79 = vunpack.c.l.b16 %v34
  %v80 = vunpack.c.l.b16 %v35
  %v81 = vunpack.c.l.b16 %v36
  %v82 = vunpack.c.l.b16 %v37
  %v83 = vunpack.c.l.b16 %v38
  %v84 = vpack.c.b16 %v69, %v68
  %v85 = vpack.c.b16 %v71, %v70
  %v86 = vpack.c.b16 %v73, %v72
  %v87 = vpack.c.b16 %v75, %v74
  %v88 = vpack.c.b16 %v77, %v76
  %v89 = vpack.c.b16 %v79, %v78
  %v90 = vpack.c.b16 %v81, %v80
  %v91 = vpack.c.b16 %v83, %v82
  %100 = vmatprep.subr.bf16.mxu0 0
  %101 = vmatpush1.bf16.msra.mxu0 %v91
  %102 = vmatprep.subr.bf16.mxu0 0
  %103 = vmatpush1.bf16.msra.mxu0 %v90
  %104 = vmatprep.subr.bf16.mxu0 0
  %105 = vmatpush1.bf16.msra.mxu0 %v89
  %106 = vmatprep.subr.bf16.mxu0 0
  %107 = vmatpush1.bf16.msra.mxu0 %v88
  %108 = vmatprep.subr.bf16.mxu0 0
  %109 = vmatpush1.bf16.msra.mxu0 %v87
  %110 = vmatprep.subr.bf16.mxu0 0
  %111 = vmatpush1.bf16.msra.mxu0 %v86
  %112 = vmatprep.subr.bf16.mxu0 0
  %113 = vmatpush1.bf16.msra.mxu0 %v85
  %114 = vmatprep.subr.bf16.mxu0 0
  %115 = vmatpush1.bf16.msra.mxu0 %v84
  %116 = vmatprep.subr.bf16.mxu0 0
  %117 = vmatpush2.bf16.msra.mxu0 0
  %118 = vmatprep.subr.bf16.mxu0 0
  %119 = vmatpush2.bf16.msra.mxu0 0
  %120 = vmatprep.subr.bf16.mxu0 0
  %121 = vmatpush2.bf16.msra.mxu0 0
  %122 = vmatprep.subr.bf16.mxu0 0
  %123 = vmatpush2.bf16.msra.mxu0 0
  %124 = vmatprep.subr.bf16.mxu0 0
  %125 = vmatpush2.bf16.msra.mxu0 0
  %126 = vmatprep.subr.bf16.mxu0 0
  %127 = vmatpush2.bf16.msra.mxu0 0
  %128 = vmatprep.subr.bf16.mxu0 0
  %129 = vmatpush2.bf16.msra.mxu0 0
  %130 = vmatprep.subr.bf16.mxu0 0
  %131 = vmatpush2.bf16.msra.mxu0 0
  %132 = vmatprep.mubr.bf16.mxu0 0
  %133 = vmatmul.mubr.bf16.gmra.mxu0 %v50
  %v134 = vpop.f32.mrf.mxu0
  %v135 = vadd.f32 %v44, %v134
  %v136 = vpop.f32.mrf.mxu0
  %v137 = vpop.f32.mrf.mxu0
  %v138 = vadd.f32 %v44, %v137
  %v139 = vpop.f32.mrf.mxu0
  %140 = vdwg.mxu0
  %v141 = vpack.c.bf16 %v138, %v135
  %v142 = vld [vmem:[%s3] sm:$0xf]
  %v143 = vld [vmem:[%s3 + $0x4] sm:$0xf]
  %v144 = vld [vmem:[%s4] sm:$0x1]
  %v146 = vlaneseq
  %v147 = vshrl.u32 %v146, 7
  %v148 = vsub.s32 0, %v147
  %v149 = vrot.slane %v144, %v148
  %v153 = vunpack.c.l.b16 %v142
  %v154 = vunpack.c.l.b16 %v143
  %v155 = vpack.c.b16 %v154, %v153
  %vm157 = vcmask 130048
  %v159 = vsel %vm157, %v141, 0
  %161 = vmatprep.subr.bf16.mxu0 0
  %162 = vmatpush1.bf16.msra.mxu0 0
  %163 = vmatprep.subr.bf16.mxu0 0
  %164 = vmatpush1.bf16.msra.mxu0 0
  %165 = vmatprep.subr.bf16.mxu0 0
  %166 = vmatpush1.bf16.msra.mxu0 0
  %167 = vmatprep.subr.bf16.mxu0 0
  %168 = vmatpush1.bf16.msra.mxu0 0
  %169 = vmatprep.subr.bf16.mxu0 0
  %170 = vmatpush1.bf16.msra.mxu0 0
  %171 = vmatprep.subr.bf16.mxu0 0
  %172 = vmatpush1.bf16.msra.mxu0 0
  %173 = vmatprep.subr.bf16.mxu0 0
  %174 = vmatpush1.bf16.msra.mxu0 0
  %175 = vmatprep.subr.bf16.mxu0 0
  %176 = vmatpush1.bf16.msra.mxu0 %v155
  %177 = vmatprep.subr.bf16.mxu0 0
  %178 = vmatpush2.bf16.msra.mxu0 0
  %179 = vmatprep.subr.bf16.mxu0 0
  %180 = vmatpush2.bf16.msra.mxu0 0
  %181 = vmatprep.subr.bf16.mxu0 0
  %182 = vmatpush2.bf16.msra.mxu0 0
  %183 = vmatprep.subr.bf16.mxu0 0
  %184 = vmatpush2.bf16.msra.mxu0 0
  %185 = vmatprep.subr.bf16.mxu0 0
  %186 = vmatpush2.bf16.msra.mxu0 0
  %187 = vmatprep.subr.bf16.mxu0 0
  %188 = vmatpush2.bf16.msra.mxu0 0
  %189 = vmatprep.subr.bf16.mxu0 0
  %190 = vmatpush2.bf16.msra.mxu0 0
  %191 = vmatprep.subr.bf16.mxu0 0
  %192 = vmatpush2.bf16.msra.mxu0 0
  %193 = vmatprep.mubr.bf16.mxu0 0
  %194 = vmatmul.mubr.bf16.gmra.mxu0 %v159
  %v195 = vpop.f32.mrf.mxu0
  %v196 = vadd.f32 %v149, %v195
  %v197 = vpop.f32.mrf.mxu0
  %v198 = vpop.f32.mrf.mxu0
  %v199 = vadd.f32 %v149, %v198
  %v200 = vpop.f32.mrf.mxu0
  %201 = vdwg.mxu0
  %202 = vst [vmem:[%s5] sm:$0xff] %v196
  %203 = vst [vmem:[%s5 + $0x8] sm:$0xff] %v199
  // Predicated region
  $region22: #{conv_autoencoder_forward.1} parent=0 // pred_check
    _
  $region23: #{conv_autoencoder_forward.1} parent=0 // pred_check_branch
    %205 = sbr.rel (0) target = $region25
  $region24: #{conv_autoencoder_forward.1} parent=0 // pred_region
    _
  $region25: #{conv_autoencoder_forward.1} parent=0 // pred_fallthru
    _
  // Predicated region
  $region26: #{conv_autoencoder_forward.1} parent=0 // pred_check
    _
  $region27: #{conv_autoencoder_forward.1} parent=0 // pred_check_branch
    %207 = sbr.rel (0) target = $region29
  $region28: #{conv_autoencoder_forward.1} parent=0 // pred_region
    _
  $region29: #{conv_autoencoder_forward.1} parent=0 // pred_fallthru
    _

</llo_original>
